<compile_context>
chip_gen: v6e
topology: v6e:2x2x1
jax: 0.10.0
libtpu: 0.0.40
codegen_flags: <defaults>
</compile_context>

<pallas_src>
import functools

import jax
import jax.numpy as jnp
from jax.experimental import pallas as pl
from jax.experimental.pallas import tpu as pltpu


# ----------------------------------------------------------------------------
# Tile selection helper
# ----------------------------------------------------------------------------
def _pick_tile(size, pref, align):
    """Largest divisor of `size` that is <= pref and a multiple of `align`,
    falling back to the full dimension (always a legal BlockSpec block)."""
    for t in range(min(pref, size), 0, -1):
        if size % t == 0 and t % align == 0:
            return t
    return size


# ----------------------------------------------------------------------------
# Tiled matmul kernels (projections).  Operands stay in their native dtype
# (bf16 stays bf16 on the MXU); only the accumulator is f32.
# ----------------------------------------------------------------------------
def _matmul_kernel(x_ref, w_ref, o_ref, acc_ref):
    kk = pl.program_id(2)

    @pl.when(kk == 0)
    def _():
        acc_ref[...] = jnp.zeros_like(acc_ref)

    acc_ref[...] += jnp.dot(x_ref[...], w_ref[...],
                            preferred_element_type=jnp.float32)

    @pl.when(kk == pl.num_programs(2) - 1)
    def _():
        o_ref[...] = acc_ref[...].astype(o_ref.dtype)


def _matmul_bias_kernel(x_ref, w_ref, b_ref, o_ref, acc_ref):
    kk = pl.program_id(2)

    @pl.when(kk == 0)
    def _():
        acc_ref[...] = jnp.zeros_like(acc_ref)

    acc_ref[...] += jnp.dot(x_ref[...], w_ref[...],
                            preferred_element_type=jnp.float32)

    @pl.when(kk == pl.num_programs(2) - 1)
    def _():
        o_ref[...] = (acc_ref[...] + b_ref[...].astype(jnp.float32)).astype(o_ref.dtype)


def linear(x2d, w, b=None, *, tm_pref=256, tn_pref=256, tk_pref=512):
    """y = x2d @ w (+ b) with a Pallas tiled-matmul kernel. x2d: (M, K), w: (K, N)."""
    m, k = x2d.shape
    k2, n = w.shape
    assert k == k2

    tm = _pick_tile(m, tm_pref, 8)     # sublane axis of x / out
    tn = _pick_tile(n, tn_pref, 128)   # lane axis of w / out
    tk = _pick_tile(k, tk_pref, 128)   # lane axis of x, sublane axis of w
    grid = (m // tm, n // tn, k // tk)

    if b is None:
        kernel = _matmul_kernel
        in_specs = [
            pl.BlockSpec((tm, tk), lambda i, j, kk: (i, kk)),
            pl.BlockSpec((tk, tn), lambda i, j, kk: (kk, j)),
        ]
        args = (x2d, w)
    else:
        kernel = _matmul_bias_kernel
        in_specs = [
            pl.BlockSpec((tm, tk), lambda i, j, kk: (i, kk)),
            pl.BlockSpec((tk, tn), lambda i, j, kk: (kk, j)),
            pl.BlockSpec((1, tn), lambda i, j, kk: (0, j)),
        ]
        args = (x2d, w, b.reshape(1, n).astype(x2d.dtype))

    return pl.pallas_call(
        kernel,
        out_shape=jax.ShapeDtypeStruct((m, n), x2d.dtype),
        grid_spec=pltpu.PrefetchScalarGridSpec(
            num_scalar_prefetch=0,
            grid=grid,
            in_specs=in_specs,
            out_specs=pl.BlockSpec((tm, tn), lambda i, j, kk: (i, j)),
            scratch_shapes=[pltpu.VMEM((tm, tn), jnp.float32)],
        ),
        compiler_params=pltpu.CompilerParams(
            dimension_semantics=("parallel", "parallel", "arbitrary")
        ),
    )(*args)


# ----------------------------------------------------------------------------
# Flash-attention kernel with an additive (relative-position) bias
# ----------------------------------------------------------------------------
def _flash_attn_bias_kernel(q_ref, k_ref, v_ref, bias_ref, o_ref,
                            m_sc, l_sc, acc_sc):
    ki = pl.program_id(2)

    @pl.when(ki == 0)
    def _():
        m_sc[...] = jnp.full_like(m_sc, -jnp.inf)
        l_sc[...] = jnp.zeros_like(l_sc)
        acc_sc[...] = jnp.zeros_like(acc_sc)

    q = q_ref[0]                               # (tq, d)  -- already scaled
    k = k_ref[0]                               # (tk, d)
    v = v_ref[0]                               # (tk, d)
    bias = bias_ref[0].astype(jnp.float32)     # (tq, tk)

    # content scores on the MXU + precomputed relative-position bias (VPU add)
    s = jnp.dot(q, k.T, preferred_element_type=jnp.float32) + bias

    # online softmax update
    m_prev = m_sc[...]
    m_new = jnp.maximum(m_prev, s.max(axis=-1, keepdims=True))
    alpha = jnp.exp(m_prev - m_new)
    p = jnp.exp(s - m_new)
    l_sc[...] = alpha * l_sc[...] + p.sum(axis=-1, keepdims=True)
    acc_sc[...] = alpha * acc_sc[...] + jnp.dot(
        p.astype(v.dtype), v, preferred_element_type=jnp.float32)
    m_sc[...] = m_new

    @pl.when(ki == pl.num_programs(2) - 1)
    def _():
        inv_l = pl.reciprocal(l_sc[...], approx=True)
        o_ref[0] = (acc_sc[...] * inv_l).astype(o_ref.dtype)


def flash_attention_bias(q, k, v, bias, *, tq_pref=256, tk_pref=256):
    """q: (BH, N, D), k/v: (BH, M, D), bias: (BH, N, M) -> (BH, N, D).
    Scores are q @ k.T + bias (q is expected to be pre-scaled)."""
    bh, n, d = q.shape
    _, m, _ = k.shape
    tq = _pick_tile(n, tq_pref, 8)
    tk = _pick_tile(m, tk_pref, 128)   # lane axis of the scores: keep it 128-dense
    grid = (bh, n // tq, m // tk)

    return pl.pallas_call(
        _flash_attn_bias_kernel,
        out_shape=jax.ShapeDtypeStruct((bh, n, d), q.dtype),
        grid_spec=pltpu.PrefetchScalarGridSpec(
            num_scalar_prefetch=0,
            grid=grid,
            in_specs=[
                pl.BlockSpec((1, tq, d), lambda b, qi, ki: (b, qi, 0)),
                pl.BlockSpec((1, tk, d), lambda b, qi, ki: (b, ki, 0)),
                pl.BlockSpec((1, tk, d), lambda b, qi, ki: (b, ki, 0)),
                pl.BlockSpec((1, tq, tk), lambda b, qi, ki: (b, qi, ki)),
            ],
            out_specs=pl.BlockSpec((1, tq, d), lambda b, qi, ki: (b, qi, 0)),
            scratch_shapes=[
                pltpu.VMEM((tq, 1), jnp.float32),   # running max
                pltpu.VMEM((tq, 1), jnp.float32),   # running denom
                pltpu.VMEM((tq, d), jnp.float32),   # output accumulator
            ],
        ),
        compiler_params=pltpu.CompilerParams(
            dimension_semantics=("parallel", "parallel", "arbitrary")
        ),
    )(q, k, v, bias)


# ----------------------------------------------------------------------------
# Full module forward
# ----------------------------------------------------------------------------
def init_params(key, dim, heads, dim_head, max_pos_emb, dtype=jnp.float32):
    inner = heads * dim_head
    k1, k2, k3, k4, k5 = jax.random.split(key, 5)
    return dict(
        wq=jax.random.normal(k1, (dim, inner), dtype) / jnp.sqrt(dim).astype(dtype),
        wkv=jax.random.normal(k2, (dim, 2 * inner), dtype) / jnp.sqrt(dim).astype(dtype),
        wo=jax.random.normal(k3, (inner, dim), dtype) / jnp.sqrt(inner).astype(dtype),
        bo=jax.random.normal(k4, (dim,), dtype) * 0.01,
        rel_emb=jax.random.normal(k5, (2 * max_pos_emb + 1, dim_head), dtype) * 0.25,
    )


def attention_forward(params, x, *, heads, dim_head, max_pos_emb, context=None):
    b, n, dim = x.shape
    ctx = x if context is None else context
    m = ctx.shape[1]
    inner = heads * dim_head
    scale = dim_head ** -0.5

    # --- projections (Pallas tiled matmuls) ---------------------------------
    # Fold the 1/sqrt(dim_head) scale into Wq (bias-free linear projection).
    wq_scaled = params["wq"] * jnp.asarray(scale, params["wq"].dtype)
    q2d = linear(x.reshape(b * n, dim), wq_scaled)                    # (B*N, inner)
    # Split Wkv into its K / V halves (weight slices are tiny) instead of
    # slicing the (B*M, 2*inner) activation afterwards.
    k2d = linear(ctx.reshape(b * m, dim), params["wkv"][:, :inner])   # (B*M, inner)
    v2d = linear(ctx.reshape(b * m, dim), params["wkv"][:, inner:])   # (B*M, inner)

    def split_heads(t, length):
        return (t.reshape(b, length, heads, dim_head)
                 .transpose(0, 2, 1, 3)
                 .reshape(b * heads, length, dim_head))

    qh = split_heads(q2d, n)     # (B*H, N, Dh), pre-scaled
    kh = split_heads(k2d, m)
    vh = split_heads(v2d, m)

    # --- relative positional bias --------------------------------------------
    # pos[z, i, j] = q[z, i, :] . rel_emb[clip(i - j, -P, P) + P, :]
    # One dense MXU matmul against the small table, then a distance gather.
    # The (N, M, Dh) gathered-embedding tensor is never materialized and the
    # Pallas attention kernel only streams a small (tq, tk) bias tile per step.
    i_idx = jnp.arange(n)[:, None]
    j_idx = jnp.arange(m)[None, :]
    dist = jnp.clip(i_idx - j_idx, -max_pos_emb, max_pos_emb) + max_pos_emb   # (N, M)
    qr = jnp.einsum("znd,rd->znr", qh, params["rel_emb"].astype(qh.dtype))    # (B*H, N, 2P+1)
    dist_b = jnp.broadcast_to(dist[None, :, :], (qh.shape[0], n, m))
    pos = jnp.take_along_axis(qr, dist_b, axis=-1)                            # (B*H, N, M)

    # --- attention core (Pallas flash kernel, online softmax) ----------------
    oh = flash_attention_bias(qh, kh, vh, pos.astype(jnp.float32))            # (B*H, N, Dh)

    # merge heads and output projection (with bias)
    o = (oh.reshape(b, heads, n, dim_head)
           .transpose(0, 2, 1, 3)
           .reshape(b * n, inner))
    out = linear(o, params["wo"], params["bo"])
    return out.reshape(b, n, dim)


# ----------------------------------------------------------------------------
# Pure-JAX reference (mirrors the PyTorch forward without mask/dropout)
# ----------------------------------------------------------------------------
def attention_reference(params, x, *, heads, dim_head, max_pos_emb):
    b, n, dim = x.shape
    inner = heads * dim_head
    scale = dim_head ** -0.5
    q = x @ params["wq"]
    kv = x @ params["wkv"]
    k, v = kv[..., :inner], kv[..., inner:]

    def sh(t):
        return t.reshape(b, n, heads, dim_head).transpose(0, 2, 1, 3)

    q, k, v = sh(q), sh(k), sh(v)
    dots = jnp.einsum("bhid,bhjd->bhij", q, k) * scale
    i_idx = jnp.arange(n)[:, None]
    j_idx = jnp.arange(n)[None, :]
    dist = jnp.clip(i_idx - j_idx, -max_pos_emb, max_pos_emb) + max_pos_emb
    rel = params["rel_emb"][dist]
    pos = jnp.einsum("bhid,ijd->bhij", q, rel) * scale
    attn = jax.nn.softmax(dots + pos, axis=-1)
    out = jnp.einsum("bhij,bhjd->bhid", attn, v)
    out = out.transpose(0, 2, 1, 3).reshape(b, n, inner)
    return out @ params["wo"] + params["bo"]


if __name__ == "__main__":
    key = jax.random.PRNGKey(0)
    batch, seq, dim = 2, 8, 32
    heads, dim_head, max_pos_emb = 4, 16, 512

    kx, kp = jax.random.split(key)
    x = jax.random.normal(kx, (batch, seq, dim), dtype=jnp.float32)
    params = init_params(kp, dim, heads, dim_head, max_pos_emb)

    fwd = jax.jit(functools.partial(attention_forward, heads=heads,
                                    dim_head=dim_head, max_pos_emb=max_pos_emb))
    y = jax.block_until_ready(fwd(params, x))

    y_ref = attention_reference(params, x, heads=heads, dim_head=dim_head,
                                max_pos_emb=max_pos_emb)
    assert y.shape == (batch, seq, dim), (y.shape, (batch, seq, dim))
    max_err = float(jnp.max(jnp.abs(y - y_ref)))
    assert jnp.allclose(y, y_ref, atol=5e-2, rtol=5e-2), f"mismatch, max_err={max_err}"

    print("KERNEL_OK")
</pallas_src>

<mosaic_0001>
module attributes {stable_mosaic.version = 11 : i64} {
  func.func @_matmul_kernel(%arg0: i32, %arg1: i32, %arg2: i32, %arg3: memref<16x32xf32, #tpu.memory_space<vmem>>, %arg4: memref<32x64xf32, #tpu.memory_space<vmem>>, %arg5: memref<16x64xf32, #tpu.memory_space<vmem>>, %arg6: memref<16x64xf32, #tpu.memory_space<vmem>>) attributes {dimension_semantics = [#tpu.dimension_semantics<parallel>, #tpu.dimension_semantics<parallel>, #tpu.dimension_semantics<arbitrary>], iteration_bounds = array<i64: 1, 1, 1>, scalar_prefetch = 0 : i64, scratch_operands = 1 : i64, tpu.core_type = #tpu.core_type<tc>, window_params = [{transform_indices = @transform_0, window_bounds = array<i64: 16, 32>}, {transform_indices = @transform_1, window_bounds = array<i64: 32, 64>}, {transform_indices = @transform_2, window_bounds = array<i64: 16, 64>}]} {
    %c0_i32 = arith.constant 0 : i32
    %0 = arith.cmpi eq, %arg2, %c0_i32 : i32
    %1 = arith.extui %0 : i1 to i32
    %c0_i32_0 = arith.constant 0 : i32
    %2 = arith.cmpi ne, %1, %c0_i32_0 : i32
    scf.if %2 {
      %cst_10 = arith.constant 0.000000e+00 : f32
      %12 = vector.broadcast %cst_10 : f32 to vector<16x64xf32>
      %c0_11 = arith.constant 0 : index
      %c0_12 = arith.constant 0 : index
      %13 = vector.load %arg6[%c0_11, %c0_12] : memref<16x64xf32, #tpu.memory_space<vmem>>, vector<16x64xf32>
      tpu.vector_store %arg6[%c0_11, %c0_12], %12 {strides = array<i32>} : memref<16x64xf32, #tpu.memory_space<vmem>>, vector<16x64xf32>,
    } else {
    }
    %c0 = arith.constant 0 : index
    %c0_1 = arith.constant 0 : index
    %3 = vector.load %arg6[%c0, %c0_1] : memref<16x64xf32, #tpu.memory_space<vmem>>, vector<16x64xf32>
    %c0_2 = arith.constant 0 : index
    %c0_3 = arith.constant 0 : index
    %4 = vector.load %arg3[%c0_2, %c0_3] : memref<16x32xf32, #tpu.memory_space<vmem>>, vector<16x32xf32>
    %c0_4 = arith.constant 0 : index
    %c0_5 = arith.constant 0 : index
    %5 = vector.load %arg4[%c0_4, %c0_5] : memref<32x64xf32, #tpu.memory_space<vmem>>, vector<32x64xf32>
    %cst = arith.constant dense<0.000000e+00> : vector<16x64xf32>
    %6 = tpu.matmul %4, %5, %cst {dimension_numbers = #tpu.dot_dimension_numbers<[1], [0], [0], [1], [0, 0, 1, 1], [], []>} : vector<16x32xf32>, vector<32x64xf32>, vector<16x64xf32> -> vector<16x64xf32>
    %7 = arith.addf %3, %6 : vector<16x64xf32>
    %c0_6 = arith.constant 0 : index
    %c0_7 = arith.constant 0 : index
    %8 = vector.load %arg6[%c0_6, %c0_7] : memref<16x64xf32, #tpu.memory_space<vmem>>, vector<16x64xf32>
    tpu.vector_store %arg6[%c0_6, %c0_7], %7 {strides = array<i32>} : memref<16x64xf32, #tpu.memory_space<vmem>>, vector<16x64xf32>,
    %c0_i32_8 = arith.constant 0 : i32
    %9 = arith.cmpi eq, %arg2, %c0_i32_8 : i32
    %10 = arith.extui %9 : i1 to i32
    %c0_i32_9 = arith.constant 0 : i32
    %11 = arith.cmpi ne, %10, %c0_i32_9 : i32
    scf.if %11 {
      %c0_10 = arith.constant 0 : index
      %c0_11 = arith.constant 0 : index
      %12 = vector.load %arg6[%c0_10, %c0_11] : memref<16x64xf32, #tpu.memory_space<vmem>>, vector<16x64xf32>
      %c0_12 = arith.constant 0 : index
      %c0_13 = arith.constant 0 : index
      %13 = vector.load %arg5[%c0_12, %c0_13] : memref<16x64xf32, #tpu.memory_space<vmem>>, vector<16x64xf32>
      tpu.vector_store %arg5[%c0_12, %c0_13], %12 {strides = array<i32>} : memref<16x64xf32, #tpu.memory_space<vmem>>, vector<16x64xf32>,
    } else {
    }
    return
  }
  func.func @transform_0(%arg0: i32, %arg1: i32, %arg2: i32) -> (i32, i32) {
    %c0_i32 = arith.constant 0 : i32
    return %arg0, %arg2 : i32, i32
  }
  func.func @transform_1(%arg0: i32, %arg1: i32, %arg2: i32) -> (i32, i32) {
    %c0_i32 = arith.constant 0 : i32
    return %arg2, %arg1 : i32, i32
  }
  func.func @transform_2(%arg0: i32, %arg1: i32, %arg2: i32) -> (i32, i32) {
    %c0_i32 = arith.constant 0 : i32
    return %arg0, %arg1 : i32, i32
  }
}

module attributes {stable_mosaic.version = 11 : i64} {
  func.func @_flash_attn_bias_kernel(%arg0: i32, %arg1: i32, %arg2: i32, %arg3: memref<1x8x16xf32, #tpu.memory_space<vmem>>, %arg4: memref<1x8x16xf32, #tpu.memory_space<vmem>>, %arg5: memref<1x8x16xf32, #tpu.memory_space<vmem>>, %arg6: memref<1x8x8xf32, #tpu.memory_space<vmem>>, %arg7: memref<1x8x16xf32, #tpu.memory_space<vmem>>, %arg8: memref<8x1xf32, #tpu.memory_space<vmem>>, %arg9: memref<8x1xf32, #tpu.memory_space<vmem>>, %arg10: memref<8x16xf32, #tpu.memory_space<vmem>>) attributes {dimension_semantics = [#tpu.dimension_semantics<parallel>, #tpu.dimension_semantics<parallel>, #tpu.dimension_semantics<arbitrary>], iteration_bounds = array<i64: 8, 1, 1>, scalar_prefetch = 0 : i64, scratch_operands = 3 : i64, tpu.core_type = #tpu.core_type<tc>, window_params = [{transform_indices = @transform_0, window_bounds = array<i64: 1, 8, 16>}, {transform_indices = @transform_1, window_bounds = array<i64: 1, 8, 16>}, {transform_indices = @transform_2, window_bounds = array<i64: 1, 8, 16>}, {transform_indices = @transform_3, window_bounds = array<i64: 1, 8, 8>}, {transform_indices = @transform_4, window_bounds = array<i64: 1, 8, 16>}]} {
    %c0_i32 = arith.constant 0 : i32
    %0 = arith.cmpi eq, %arg2, %c0_i32 : i32
    %1 = arith.extui %0 : i1 to i32
    %c0_i32_0 = arith.constant 0 : i32
    %2 = arith.cmpi ne, %1, %c0_i32_0 : i32
    scf.if %2 {
      %cst_29 = arith.constant 0xFF800000 : f32
      %39 = vector.broadcast %cst_29 : f32 to vector<8x1xf32>
      %c0_30 = arith.constant 0 : index
      %c0_31 = arith.constant 0 : index
      %40 = vector.load %arg8[%c0_30, %c0_31] : memref<8x1xf32, #tpu.memory_space<vmem>>, vector<8x1xf32>
      tpu.vector_store %arg8[%c0_30, %c0_31], %39 {strides = array<i32>} : memref<8x1xf32, #tpu.memory_space<vmem>>, vector<8x1xf32>,
      %cst_32 = arith.constant 0.000000e+00 : f32
      %41 = vector.broadcast %cst_32 : f32 to vector<8x1xf32>
      %c0_33 = arith.constant 0 : index
      %c0_34 = arith.constant 0 : index
      %42 = vector.load %arg9[%c0_33, %c0_34] : memref<8x1xf32, #tpu.memory_space<vmem>>, vector<8x1xf32>
      tpu.vector_store %arg9[%c0_33, %c0_34], %41 {strides = array<i32>} : memref<8x1xf32, #tpu.memory_space<vmem>>, vector<8x1xf32>,
      %cst_35 = arith.constant 0.000000e+00 : f32
      %43 = vector.broadcast %cst_35 : f32 to vector<8x16xf32>
      %c0_36 = arith.constant 0 : index
      %c0_37 = arith.constant 0 : index
      %44 = vector.load %arg10[%c0_36, %c0_37] : memref<8x16xf32, #tpu.memory_space<vmem>>, vector<8x16xf32>
      tpu.vector_store %arg10[%c0_36, %c0_37], %43 {strides = array<i32>} : memref<8x16xf32, #tpu.memory_space<vmem>>, vector<8x16xf32>,
    } else {
    }
    %c0 = arith.constant 0 : index
    %c0_1 = arith.constant 0 : index
    %c0_2 = arith.constant 0 : index
    %3 = vector.load %arg3[%c0, %c0_1, %c0_2] : memref<1x8x16xf32, #tpu.memory_space<vmem>>, vector<1x8x16xf32>
    %4 = vector.shape_cast %3 : vector<1x8x16xf32> to vector<8x16xf32>
    %c0_3 = arith.constant 0 : index
    %c0_4 = arith.constant 0 : index
    %c0_5 = arith.constant 0 : index
    %5 = vector.load %arg4[%c0_3, %c0_4, %c0_5] : memref<1x8x16xf32, #tpu.memory_space<vmem>>, vector<1x8x16xf32>
    %6 = vector.shape_cast %5 : vector<1x8x16xf32> to vector<8x16xf32>
    %c0_6 = arith.constant 0 : index
    %c0_7 = arith.constant 0 : index
    %c0_8 = arith.constant 0 : index
    %7 = vector.load %arg5[%c0_6, %c0_7, %c0_8] : memref<1x8x16xf32, #tpu.memory_space<vmem>>, vector<1x8x16xf32>
    %8 = vector.shape_cast %7 : vector<1x8x16xf32> to vector<8x16xf32>
    %c0_9 = arith.constant 0 : index
    %c0_10 = arith.constant 0 : index
    %c0_11 = arith.constant 0 : index
    %9 = vector.load %arg6[%c0_9, %c0_10, %c0_11] : memref<1x8x8xf32, #tpu.memory_space<vmem>>, vector<1x8x8xf32>
    %10 = vector.shape_cast %9 : vector<1x8x8xf32> to vector<8x8xf32>
    %11 = tpu.transpose %6, [1, 0] : vector<8x16xf32> -> vector<16x8xf32>
    %cst = arith.constant dense<0.000000e+00> : vector<8x8xf32>
    %12 = tpu.matmul %4, %11, %cst {dimension_numbers = #tpu.dot_dimension_numbers<[1], [0], [0], [1], [0, 0, 1, 1], [], []>} : vector<8x16xf32>, vector<16x8xf32>, vector<8x8xf32> -> vector<8x8xf32>
    %13 = arith.addf %12, %10 : vector<8x8xf32>
    %c0_12 = arith.constant 0 : index
    %c0_13 = arith.constant 0 : index
    %14 = vector.load %arg8[%c0_12, %c0_13] : memref<8x1xf32, #tpu.memory_space<vmem>>, vector<8x1xf32>
    %cst_14 = arith.constant dense<0xFF800000> : vector<8xf32>
    %15 = vector.multi_reduction <maximumf>, %13, %cst_14 [1] : vector<8x8xf32> to vector<8xf32>
    %16 = vector.shape_cast %15 : vector<8xf32> to vector<8x1xf32>
    %17 = arith.maximumf %14, %16 : vector<8x1xf32>
    %18 = arith.subf %14, %17 : vector<8x1xf32>
    %19 = math.exp %18 : vector<8x1xf32>
    %20 = vector.broadcast %17 : vector<8x1xf32> to vector<8x8xf32>
    %21 = arith.subf %13, %20 : vector<8x8xf32>
    %22 = math.exp %21 : vector<8x8xf32>
    %c0_15 = arith.constant 0 : index
    %c0_16 = arith.constant 0 : index
    %23 = vector.load %arg9[%c0_15, %c0_16] : memref<8x1xf32, #tpu.memory_space<vmem>>, vector<8x1xf32>
    %24 = arith.mulf %19, %23 : vector<8x1xf32>
    %cst_17 = arith.constant dense<0.000000e+00> : vector<8xf32>
    %25 = vector.multi_reduction <add>, %22, %cst_17 [1] : vector<8x8xf32> to vector<8xf32>
    %26 = vector.shape_cast %25 : vector<8xf32> to vector<8x1xf32>
    %27 = arith.addf %24, %26 : vector<8x1xf32>
    %c0_18 = arith.constant 0 : index
    %c0_19 = arith.constant 0 : index
    %28 = vector.load %arg9[%c0_18, %c0_19] : memref<8x1xf32, #tpu.memory_space<vmem>>, vector<8x1xf32>
    tpu.vector_store %arg9[%c0_18, %c0_19], %27 {strides = array<i32>} : memref<8x1xf32, #tpu.memory_space<vmem>>, vector<8x1xf32>,
    %c0_20 = arith.constant 0 : index
    %c0_21 = arith.constant 0 : index
    %29 = vector.load %arg10[%c0_20, %c0_21] : memref<8x16xf32, #tpu.memory_space<vmem>>, vector<8x16xf32>
    %30 = vector.broadcast %19 : vector<8x1xf32> to vector<8x16xf32>
    %31 = arith.mulf %30, %29 : vector<8x16xf32>
    %cst_22 = arith.constant dense<0.000000e+00> : vector<8x16xf32>
    %32 = tpu.matmul %22, %8, %cst_22 {dimension_numbers = #tpu.dot_dimension_numbers<[1], [0], [0], [1], [0, 0, 1, 1], [], []>} : vector<8x8xf32>, vector<8x16xf32>, vector<8x16xf32> -> vector<8x16xf32>
    %33 = arith.addf %31, %32 : vector<8x16xf32>
    %c0_23 = arith.constant 0 : index
    %c0_24 = arith.constant 0 : index
    %34 = vector.load %arg10[%c0_23, %c0_24] : memref<8x16xf32, #tpu.memory_space<vmem>>, vector<8x16xf32>
    tpu.vector_store %arg10[%c0_23, %c0_24], %33 {strides = array<i32>} : memref<8x16xf32, #tpu.memory_space<vmem>>, vector<8x16xf32>,
    %c0_25 = arith.constant 0 : index
    %c0_26 = arith.constant 0 : index
    %35 = vector.load %arg8[%c0_25, %c0_26] : memref<8x1xf32, #tpu.memory_space<vmem>>, vector<8x1xf32>
    tpu.vector_store %arg8[%c0_25, %c0_26], %17 {strides = array<i32>} : memref<8x1xf32, #tpu.memory_space<vmem>>, vector<8x1xf32>,
    %c0_i32_27 = arith.constant 0 : i32
    %36 = arith.cmpi eq, %arg2, %c0_i32_27 : i32
    %37 = arith.extui %36 : i1 to i32
    %c0_i32_28 = arith.constant 0 : i32
    %38 = arith.cmpi ne, %37, %c0_i32_28 : i32
    scf.if %38 {
      %c0_29 = arith.constant 0 : index
      %c0_30 = arith.constant 0 : index
      %39 = vector.load %arg9[%c0_29, %c0_30] : memref<8x1xf32, #tpu.memory_space<vmem>>, vector<8x1xf32>
      %40 = tpu.reciprocal %39 {approx = true} : vector<8x1xf32> -> vector<8x1xf32>
      %c0_31 = arith.constant 0 : index
      %c0_32 = arith.constant 0 : index
      %41 = vector.load %arg10[%c0_31, %c0_32] : memref<8x16xf32, #tpu.memory_space<vmem>>, vector<8x16xf32>
      %42 = vector.broadcast %40 : vector<8x1xf32> to vector<8x16xf32>
      %43 = arith.mulf %41, %42 : vector<8x16xf32>
      %c0_33 = arith.constant 0 : index
      %c0_34 = arith.constant 0 : index
      %c0_35 = arith.constant 0 : index
      %44 = vector.load %arg7[%c0_33, %c0_34, %c0_35] : memref<1x8x16xf32, #tpu.memory_space<vmem>>, vector<1x8x16xf32>
      %45 = vector.shape_cast %44 : vector<1x8x16xf32> to vector<8x16xf32>
      %46 = vector.shape_cast %43 : vector<8x16xf32> to vector<1x8x16xf32>
      tpu.vector_store %arg7[%c0_33, %c0_34, %c0_35], %46 {strides = array<i32>} : memref<1x8x16xf32, #tpu.memory_space<vmem>>, vector<1x8x16xf32>,
    } else {
    }
    return
  }
  func.func @transform_0(%arg0: i32, %arg1: i32, %arg2: i32) -> (i32, i32, i32) {
    %c0_i32 = arith.constant 0 : i32
    %c0_i32_0 = arith.constant 0 : i32
    return %arg0, %arg1, %c0_i32 : i32, i32, i32
  }
  func.func @transform_1(%arg0: i32, %arg1: i32, %arg2: i32) -> (i32, i32, i32) {
    %c0_i32 = arith.constant 0 : i32
    %c0_i32_0 = arith.constant 0 : i32
    return %arg0, %arg2, %c0_i32 : i32, i32, i32
  }
  func.func @transform_2(%arg0: i32, %arg1: i32, %arg2: i32) -> (i32, i32, i32) {
    %c0_i32 = arith.constant 0 : i32
    %c0_i32_0 = arith.constant 0 : i32
    return %arg0, %arg2, %c0_i32 : i32, i32, i32
  }
  func.func @transform_3(%arg0: i32, %arg1: i32, %arg2: i32) -> (i32, i32, i32) {
    %c0_i32 = arith.constant 0 : i32
    return %arg0, %arg1, %arg2 : i32, i32, i32
  }
  func.func @transform_4(%arg0: i32, %arg1: i32, %arg2: i32) -> (i32, i32, i32) {
    %c0_i32 = arith.constant 0 : i32
    %c0_i32_0 = arith.constant 0 : i32
    return %arg0, %arg1, %c0_i32 : i32, i32, i32
  }
}

module attributes {stable_mosaic.version = 11 : i64} {
  func.func @_matmul_bias_kernel(%arg0: i32, %arg1: i32, %arg2: i32, %arg3: memref<16x64xf32, #tpu.memory_space<vmem>>, %arg4: memref<64x32xf32, #tpu.memory_space<vmem>>, %arg5: memref<1x32xf32, #tpu.memory_space<vmem>>, %arg6: memref<16x32xf32, #tpu.memory_space<vmem>>, %arg7: memref<16x32xf32, #tpu.memory_space<vmem>>) attributes {dimension_semantics = [#tpu.dimension_semantics<parallel>, #tpu.dimension_semantics<parallel>, #tpu.dimension_semantics<arbitrary>], iteration_bounds = array<i64: 1, 1, 1>, scalar_prefetch = 0 : i64, scratch_operands = 1 : i64, tpu.core_type = #tpu.core_type<tc>, window_params = [{transform_indices = @transform_0, window_bounds = array<i64: 16, 64>}, {transform_indices = @transform_1, window_bounds = array<i64: 64, 32>}, {transform_indices = @transform_2, window_bounds = array<i64: 1, 32>}, {transform_indices = @transform_3, window_bounds = array<i64: 16, 32>}]} {
    %c0_i32 = arith.constant 0 : i32
    %0 = arith.cmpi eq, %arg2, %c0_i32 : i32
    %1 = arith.extui %0 : i1 to i32
    %c0_i32_0 = arith.constant 0 : i32
    %2 = arith.cmpi ne, %1, %c0_i32_0 : i32
    scf.if %2 {
      %cst_10 = arith.constant 0.000000e+00 : f32
      %12 = vector.broadcast %cst_10 : f32 to vector<16x32xf32>
      %c0_11 = arith.constant 0 : index
      %c0_12 = arith.constant 0 : index
      %13 = vector.load %arg7[%c0_11, %c0_12] : memref<16x32xf32, #tpu.memory_space<vmem>>, vector<16x32xf32>
      tpu.vector_store %arg7[%c0_11, %c0_12], %12 {strides = array<i32>} : memref<16x32xf32, #tpu.memory_space<vmem>>, vector<16x32xf32>,
    } else {
    }
    %c0 = arith.constant 0 : index
    %c0_1 = arith.constant 0 : index
    %3 = vector.load %arg7[%c0, %c0_1] : memref<16x32xf32, #tpu.memory_space<vmem>>, vector<16x32xf32>
    %c0_2 = arith.constant 0 : index
    %c0_3 = arith.constant 0 : index
    %4 = vector.load %arg3[%c0_2, %c0_3] : memref<16x64xf32, #tpu.memory_space<vmem>>, vector<16x64xf32>
    %c0_4 = arith.constant 0 : index
    %c0_5 = arith.constant 0 : index
    %5 = vector.load %arg4[%c0_4, %c0_5] : memref<64x32xf32, #tpu.memory_space<vmem>>, vector<64x32xf32>
    %cst = arith.constant dense<0.000000e+00> : vector<16x32xf32>
    %6 = tpu.matmul %4, %5, %cst {dimension_numbers = #tpu.dot_dimension_numbers<[1], [0], [0], [1], [0, 0, 1, 1], [], []>} : vector<16x64xf32>, vector<64x32xf32>, vector<16x32xf32> -> vector<16x32xf32>
    %7 = arith.addf %3, %6 : vector<16x32xf32>
    %c0_6 = arith.constant 0 : index
    %c0_7 = arith.constant 0 : index
    %8 = vector.load %arg7[%c0_6, %c0_7] : memref<16x32xf32, #tpu.memory_space<vmem>>, vector<16x32xf32>
    tpu.vector_store %arg7[%c0_6, %c0_7], %7 {strides = array<i32>} : memref<16x32xf32, #tpu.memory_space<vmem>>, vector<16x32xf32>,
    %c0_i32_8 = arith.constant 0 : i32
    %9 = arith.cmpi eq, %arg2, %c0_i32_8 : i32
    %10 = arith.extui %9 : i1 to i32
    %c0_i32_9 = arith.constant 0 : i32
    %11 = arith.cmpi ne, %10, %c0_i32_9 : i32
    scf.if %11 {
      %c0_10 = arith.constant 0 : index
      %c0_11 = arith.constant 0 : index
      %12 = vector.load %arg7[%c0_10, %c0_11] : memref<16x32xf32, #tpu.memory_space<vmem>>, vector<16x32xf32>
      %c0_12 = arith.constant 0 : index
      %c0_13 = arith.constant 0 : index
      %13 = vector.load %arg5[%c0_12, %c0_13] : memref<1x32xf32, #tpu.memory_space<vmem>>, vector<1x32xf32>
      %14 = vector.broadcast %13 : vector<1x32xf32> to vector<16x32xf32>
      %15 = arith.addf %12, %14 : vector<16x32xf32>
      %c0_14 = arith.constant 0 : index
      %c0_15 = arith.constant 0 : index
      %16 = vector.load %arg6[%c0_14, %c0_15] : memref<16x32xf32, #tpu.memory_space<vmem>>, vector<16x32xf32>
      tpu.vector_store %arg6[%c0_14, %c0_15], %15 {strides = array<i32>} : memref<16x32xf32, #tpu.memory_space<vmem>>, vector<16x32xf32>,
    } else {
    }
    return
  }
  func.func @transform_0(%arg0: i32, %arg1: i32, %arg2: i32) -> (i32, i32) {
    %c0_i32 = arith.constant 0 : i32
    return %arg0, %arg2 : i32, i32
  }
  func.func @transform_1(%arg0: i32, %arg1: i32, %arg2: i32) -> (i32, i32) {
    %c0_i32 = arith.constant 0 : i32
    return %arg2, %arg1 : i32, i32
  }
  func.func @transform_2(%arg0: i32, %arg1: i32, %arg2: i32) -> (i32, i32) {
    %c0_i32 = arith.constant 0 : i32
    %c0_i32_0 = arith.constant 0 : i32
    return %c0_i32, %arg1 : i32, i32
  }
  func.func @transform_3(%arg0: i32, %arg1: i32, %arg2: i32) -> (i32, i32) {
    %c0_i32 = arith.constant 0 : i32
    return %arg0, %arg1 : i32, i32
  }
}

</mosaic_0001>

<llo_original>
// kernel: attention_forward.5
$region0: #{attention_forward.5}
  #allocation0 [shape = 'u32[]', space=smem, size = 0x4, offset = 0x4, fixed_abs, tag = 'smem constant byte address 0x4 - core index']
  #allocation1 [shape = 'u32[144,128]{1,0:T(1,128)}', space=vmem, size = 0x12000, scoped, tag = 'internal scratch']
  #allocation2 [shape = 'f32[16,64]{1,0:T(8,128)}', space=vmem, size = 0x2000, scoped, tag = 'scratch operand']
  %s0 = inlined_call_operand.vmem [shape: f32[16,32], index: 0, kind: input, shape index: {}]
  %s1 = inlined_call_operand.vmem [shape: f32[32,64], index: 1, kind: input, shape index: {}]
  %s2 = inlined_call_operand.vmem [shape: f32[16,64], index: 2, kind: output, shape index: {}]
  %s3 = sld [smem:[#allocation0]]
  $region26: #{attention_forward.5} parent=0
    _
  %s5 = ssub.s32 1, %s3
  %s6 = scalar_select 0, %s5, %s3
  // Predicated region
  $region2: #{attention_forward.5} parent=0 // pred_check
    _
  $region3: #{attention_forward.5} parent=0 // pred_check_branch
    %8 = sbr.rel (0) target = $region5
  $region4: #{attention_forward.5} parent=0 // pred_region
    _
  $region5: #{attention_forward.5} parent=0 // pred_fallthru
    _
  // Predicated region
  $region6: #{attention_forward.5} parent=0 // pred_check
    _
  $region7: #{attention_forward.5} parent=0 // pred_check_branch
    %10 = sbr.rel (0) target = $region9
  $region8: #{attention_forward.5} parent=0 // pred_region
    _
  $region9: #{attention_forward.5} parent=0 // pred_fallthru
    _
  %p11 = scmp.eq.s32.totalorder 0, 0
  // Predicated region
  $region10: #{attention_forward.5} parent=0 // pred_check
    %p12 = pneg %p11
  $region11: #{attention_forward.5} parent=0 // pred_check_branch
    %14 = sbr.rel (%p12) target = $region13
  $region12: #{attention_forward.5} parent=0 // pred_region
    %vm15 = vcmask 523264
    %16 = vst.msk [vmem:[#allocation2] sm:$0xff] %vm15, 0.0
    %17 = vst.msk [vmem:[#allocation2 + $0x8] sm:$0xff] %vm15, 0.0
  $region13: #{attention_forward.5} parent=0 // pred_fallthru
    _
  %v18 = vld [vmem:[#allocation2] sm:$0xff]
  %v19 = vld [vmem:[#allocation2 + $0x8] sm:$0xff]
  %v20 = vld [vmem:[%s0] sm:$0xff]
  %v21 = vld [vmem:[%s0 + $0x8] sm:$0xff]
  %v22 = vld [vmem:[%s1] sm:$0xff]
  %v23 = vld [vmem:[%s1 + $0x8] sm:$0xff]
  %v24 = vld [vmem:[%s1 + $0x10] sm:$0xff]
  %v25 = vld [vmem:[%s1 + $0x18] sm:$0xff]
  %vm26 = vcmask 261120
  %v28 = vsel %vm26, %v20, 0
  %v31 = vsel %vm26, %v21, 0
  %33 = vmatprep.subr.mxu0 0.0
  %34 = vmatpush1.msra.mxu0 0.0
  %35 = vmatprep.subr.mxu0 0.0
  %36 = vmatpush1.msra.mxu0 0.0
  %37 = vmatprep.subr.mxu0 0.0
  %38 = vmatpush1.msra.mxu0 0.0
  %39 = vmatprep.subr.mxu0 0.0
  %40 = vmatpush1.msra.mxu0 0.0
  %41 = vmatprep.subr.mxu0 0.0
  %42 = vmatpush1.msra.mxu0 0.0
  %43 = vmatprep.subr.mxu0 0.0
  %44 = vmatpush1.msra.mxu0 0.0
  %45 = vmatprep.subr.mxu0 0.0
  %46 = vmatpush1.msra.mxu0 0.0
  %47 = vmatprep.subr.mxu0 0.0
  %48 = vmatpush1.msra.mxu0 0.0
  %49 = vmatprep.subr.mxu0 0.0
  %50 = vmatpush1.msra.mxu0 0.0
  %51 = vmatprep.subr.mxu0 0.0
  %52 = vmatpush1.msra.mxu0 0.0
  %53 = vmatprep.subr.mxu0 0.0
  %54 = vmatpush1.msra.mxu0 0.0
  %55 = vmatprep.subr.mxu0 0.0
  %56 = vmatpush1.msra.mxu0 0.0
  %57 = vmatprep.subr.mxu0 0.0
  %58 = vmatpush1.msra.mxu0 %v25
  %59 = vmatprep.subr.mxu0 0.0
  %60 = vmatpush1.msra.mxu0 %v24
  %61 = vmatprep.subr.mxu0 0.0
  %62 = vmatpush1.msra.mxu0 %v23
  %63 = vmatprep.subr.mxu0 0.0
  %64 = vmatpush1.msra.mxu0 %v22
  %65 = vmatprep.subr.mxu0 0.0
  %66 = vmatpush2.msra.mxu0 0.0
  %67 = vmatprep.subr.mxu0 0.0
  %68 = vmatpush2.msra.mxu0 0.0
  %69 = vmatprep.subr.mxu0 0.0
  %70 = vmatpush2.msra.mxu0 0.0
  %71 = vmatprep.subr.mxu0 0.0
  %72 = vmatpush2.msra.mxu0 0.0
  %73 = vmatprep.subr.mxu0 0.0
  %74 = vmatpush2.msra.mxu0 0.0
  %75 = vmatprep.subr.mxu0 0.0
  %76 = vmatpush2.msra.mxu0 0.0
  %77 = vmatprep.subr.mxu0 0.0
  %78 = vmatpush2.msra.mxu0 0.0
  %79 = vmatprep.subr.mxu0 0.0
  %80 = vmatpush2.msra.mxu0 0.0
  %81 = vmatprep.subr.mxu0 0.0
  %82 = vmatpush2.msra.mxu0 0.0
  %83 = vmatprep.subr.mxu0 0.0
  %84 = vmatpush2.msra.mxu0 0.0
  %85 = vmatprep.subr.mxu0 0.0
  %86 = vmatpush2.msra.mxu0 0.0
  %87 = vmatprep.subr.mxu0 0.0
  %88 = vmatpush2.msra.mxu0 0.0
  %89 = vmatprep.subr.mxu0 0.0
  %90 = vmatpush2.msra.mxu0 0.0
  %91 = vmatprep.subr.mxu0 0.0
  %92 = vmatpush2.msra.mxu0 0.0
  %93 = vmatprep.subr.mxu0 0.0
  %94 = vmatpush2.msra.mxu0 0.0
  %95 = vmatprep.subr.mxu0 0.0
  %96 = vmatpush2.msra.mxu0 0.0
  %97 = vmatprep.mubr.f32.mxu0 0.0
  %98 = vmatmul.mubr.f32.gmra.mxu0 %v28
  %v99 = vpop.f32.mrf.mxu0
  %v100 = vadd.f32 0.0, %v99
  %v101 = vpop.f32.mrf.mxu0
  %102 = vmatprep.mubr.f32.mxu0 0.0
  %103 = vmatmul.mubr.f32.gmra.mxu0 %v31
  %v104 = vpop.f32.mrf.mxu0
  %v105 = vadd.f32 0.0, %v104
  %v106 = vpop.f32.mrf.mxu0
  %107 = vdwg.mxu0
  %v108 = vadd.f32 %v18, %v100
  %v109 = vadd.f32 %v19, %v105
  %vm110 = vcmask 523264
  %111 = vst.msk [vmem:[#allocation2] sm:$0xff] %vm110, %v108
  %112 = vst.msk [vmem:[#allocation2 + $0x8] sm:$0xff] %vm110, %v109
  // Predicated region
  $region14: #{attention_forward.5} parent=0 // pred_check
    %p113 = pneg %p11
  $region15: #{attention_forward.5} parent=0 // pred_check_branch
    %115 = sbr.rel (%p113) target = $region17
  $region16: #{attention_forward.5} parent=0 // pred_region
    %v116 = vld [vmem:[#allocation2] sm:$0xff]
    %v117 = vld [vmem:[#allocation2 + $0x8] sm:$0xff]
    %118 = vst.msk [vmem:[%s2] sm:$0xff] %vm110, %v116
    %119 = vst.msk [vmem:[%s2 + $0x8] sm:$0xff] %vm110, %v117
  $region17: #{attention_forward.5} parent=0 // pred_fallthru
    _
  // Predicated region
  $region18: #{attention_forward.5} parent=0 // pred_check
    _
  $region19: #{attention_forward.5} parent=0 // pred_check_branch
    %121 = sbr.rel (0) target = $region21
  $region20: #{attention_forward.5} parent=0 // pred_region
    _
  $region21: #{attention_forward.5} parent=0 // pred_fallthru
    _
  // Predicated region
  $region22: #{attention_forward.5} parent=0 // pred_check
    _
  $region23: #{attention_forward.5} parent=0 // pred_check_branch
    %123 = sbr.rel (0) target = $region25
  $region24: #{attention_forward.5} parent=0 // pred_region
    _
  $region25: #{attention_forward.5} parent=0 // pred_fallthru
    _

// kernel: attention_forward.8
$region0: #{attention_forward.8}
  #allocation0 [shape = 'u32[]', space=smem, size = 0x4, offset = 0x4, fixed_abs, tag = 'smem constant byte address 0x4 - core index']
  #allocation1 [shape = 'u32[144,128]{1,0:T(1,128)}', space=vmem, size = 0x12000, scoped, tag = 'internal scratch']
  #allocation2 [shape = 'f32[8,1]{1,0:T(8,128)}', space=vmem, size = 0x1000, scoped, tag = 'scratch operand']
  #allocation3 [shape = 'f32[8,1]{1,0:T(8,128)}', space=vmem, size = 0x1000, scoped, tag = 'scratch operand']
  #allocation4 [shape = 'f32[8,16]{1,0:T(8,128)}', space=vmem, size = 0x1000, scoped, tag = 'scratch operand']
  %s0 = inlined_call_operand.vmem [shape: f32[8,8,16], index: 0, kind: input, shape index: {}]
  %s1 = inlined_call_operand.vmem [shape: f32[8,8,16], index: 1, kind: input, shape index: {}]
  %s2 = inlined_call_operand.vmem [shape: f32[8,8,16], index: 2, kind: input, shape index: {}]
  %s3 = inlined_call_operand.vmem [shape: f32[8,8,8], index: 3, kind: input, shape index: {}]
  %s4 = inlined_call_operand.vmem [shape: f32[8,8,16], index: 4, kind: output, shape index: {}]
  %s5 = sld [smem:[#allocation0]]
  $region57: #{attention_forward.8} parent=0
    _
  %s7 = ssub.s32 1, %s5
  %s8 = scalar_select 0, %s7, %s5
  loop: start=0, step=1, limit=10
  $region2: #{attention_forward.8} parent=0 // loop_pre_header
    _
  $region3: #{attention_forward.8} parent=0 // loop_header
    %s10 = sphi 0, %s14
    %p11 = scmp.ge.s32.totalorder %s10, 10
    %s17 = sphi 0, %s36
    %s18 = sphi 0, %s32
    %s19 = sphi 0, %s28
    %s20 = sphi 0, %s17
    %s21 = sphi 0, %s18
    %s22 = sphi 0, %s19
    %s23 = sphi 0, %s20
    %s24 = sphi 0, %s21
    %s25 = sphi 0, %s22
    %s41 = sphi 0, %s43
    %s44 = sphi 0, %s41
    %s45 = sphi 0, %s44
    %s61 = sphi 0, %s45
    %s69 = sphi 0, %s71
    %s72 = sphi 0, %s69
    %s73 = sphi 0, %s72
    %s89 = sphi 0, %s73
    %s97 = sphi 0, %s99
    %s100 = sphi 0, %s97
    %s101 = sphi 0, %s100
    %s117 = sphi 0, %s101
    %s127 = sphi 0, %s129
    %s130 = sphi 0, %s127
    %s131 = sphi 0, %s130
    %s147 = sphi 0, %s131
    %s155 = sphi 0, %s157
    %s158 = sphi 0, %s155
    %s159 = sphi 0, %s158
    %s175 = sphi 0, %s159
  $region4: #{attention_forward.8} parent=0 // loop_header_branch
    %13 = sbr.rel (%p11) target = $region8
  $region5: #{attention_forward.8} parent=0 // loop_body
    %s15 = ssub.s32 %s10, 1
    %s16 = ssub.s32 %s10, 2
    %s26 = sadd.s32 1, %s19
    %p27 = scmp.ge.s32.totalorder %s26, 1
    %s28 = scalar_select %p27, 0, %s26
    %s29 = sadd.s32 1, %s18
    %s30 = scalar_select %p27, %s29, %s18
    %p31 = scmp.ge.s32.totalorder %s30, 1
    %s32 = scalar_select %p31, 0, %s30
    %s33 = sadd.s32 1, %s17
    %s34 = scalar_select %p31, %s33, %s17
    %p35 = scmp.ge.s32.totalorder %s34, 8
    %s36 = scalar_select %p35, 0, %s34
    %s37 = ssub.s32 %s17, %s36
    %s38 = ssub.s32 %s18, %s32
    %s39 = sor.u32 %s37, %s38
    %p40 = scmp.eq.s32.totalorder %s39, 0
    %s42 = sadd.s32 %s41, 1
    %s43 = scalar_select %p40, %s41, %s42
    %p46 = pneg %p40
    %p47 = scmp.eq.s32.totalorder %s10, 7
    %p48 = por %p46, %p47
    %p49 = scmp.ne.s32.totalorder %s41, %s44
    %p50 = scmp.eq.s32.totalorder %s10, 0
    %p51 = por %p49, %p50
    %p52 = scmp.ne.s32.totalorder %s41, %s44
    %p53 = scmp.eq.s32.totalorder %s15, 7
    %p54 = por %p52, %p53
    %p55 = scmp.ne.s32.totalorder %s44, %s45
    %p56 = scmp.eq.s32.totalorder %s15, 0
    %p57 = por %p55, %p56
    %p58 = scmp.ne.s32.totalorder %s44, %s45
    %p59 = scmp.eq.s32.totalorder %s16, 7
    %p60 = por %p58, %p59
    %p62 = scmp.ne.s32.totalorder %s45, %s61
    %p63 = scmp.eq.s32.totalorder %s16, 0
    %p64 = por %p62, %p63
    %s65 = ssub.s32 %s17, %s36
    %s66 = ssub.s32 %s19, %s28
    %s67 = sor.u32 %s65, %s66
    %p68 = scmp.eq.s32.totalorder %s67, 0
    %s70 = sadd.s32 %s69, 1
    %s71 = scalar_select %p68, %s69, %s70
    %p74 = pneg %p68
    %p75 = scmp.eq.s32.totalorder %s10, 7
    %p76 = por %p74, %p75
    %p77 = scmp.ne.s32.totalorder %s69, %s72
    %p78 = scmp.eq.s32.totalorder %s10, 0
    %p79 = por %p77, %p78
    %p80 = scmp.ne.s32.totalorder %s69, %s72
    %p81 = scmp.eq.s32.totalorder %s15, 7
    %p82 = por %p80, %p81
    %p83 = scmp.ne.s32.totalorder %s72, %s73
    %p84 = scmp.eq.s32.totalorder %s15, 0
    %p85 = por %p83, %p84
    %p86 = scmp.ne.s32.totalorder %s72, %s73
    %p87 = scmp.eq.s32.totalorder %s16, 7
    %p88 = por %p86, %p87
    %p90 = scmp.ne.s32.totalorder %s73, %s89
    %p91 = scmp.eq.s32.totalorder %s16, 0
    %p92 = por %p90, %p91
    %s93 = ssub.s32 %s17, %s36
    %s94 = ssub.s32 %s19, %s28
    %s95 = sor.u32 %s93, %s94
    %p96 = scmp.eq.s32.totalorder %s95, 0
    %s98 = sadd.s32 %s97, 1
    %s99 = scalar_select %p96, %s97, %s98
    %p102 = pneg %p96
    %p103 = scmp.eq.s32.totalorder %s10, 7
    %p104 = por %p102, %p103
    %p105 = scmp.ne.s32.totalorder %s97, %s100
    %p106 = scmp.eq.s32.totalorder %s10, 0
    %p107 = por %p105, %p106
    %p108 = scmp.ne.s32.totalorder %s97, %s100
    %p109 = scmp.eq.s32.totalorder %s15, 7
    %p110 = por %p108, %p109
    %p111 = scmp.ne.s32.totalorder %s100, %s101
    %p112 = scmp.eq.s32.totalorder %s15, 0
    %p113 = por %p111, %p112
    %p114 = scmp.ne.s32.totalorder %s100, %s101
    %p115 = scmp.eq.s32.totalorder %s16, 7
    %p116 = por %p114, %p115
    %p118 = scmp.ne.s32.totalorder %s101, %s117
    %p119 = scmp.eq.s32.totalorder %s16, 0
    %p120 = por %p118, %p119
    %s121 = ssub.s32 %s17, %s36
    %s122 = ssub.s32 %s18, %s32
    %s123 = sor.u32 %s121, %s122
    %s124 = ssub.s32 %s19, %s28
    %s125 = sor.u32 %s123, %s124
    %p126 = scmp.eq.s32.totalorder %s125, 0
    %s128 = sadd.s32 %s127, 1
    %s129 = scalar_select %p126, %s127, %s128
    %p132 = pneg %p126
    %p133 = scmp.eq.s32.totalorder %s10, 7
    %p134 = por %p132, %p133
    %p135 = scmp.ne.s32.totalorder %s127, %s130
    %p136 = scmp.eq.s32.totalorder %s10, 0
    %p137 = por %p135, %p136
    %p138 = scmp.ne.s32.totalorder %s127, %s130
    %p139 = scmp.eq.s32.totalorder %s15, 7
    %p140 = por %p138, %p139
    %p141 = scmp.ne.s32.totalorder %s130, %s131
    %p142 = scmp.eq.s32.totalorder %s15, 0
    %p143 = por %p141, %p142
    %p144 = scmp.ne.s32.totalorder %s130, %s131
    %p145 = scmp.eq.s32.totalorder %s16, 7
    %p146 = por %p144, %p145
    %p148 = scmp.ne.s32.totalorder %s131, %s147
    %p149 = scmp.eq.s32.totalorder %s16, 0
    %p150 = por %p148, %p149
    %s151 = ssub.s32 %s17, %s36
    %s152 = ssub.s32 %s18, %s32
    %s153 = sor.u32 %s151, %s152
    %p154 = scmp.eq.s32.totalorder %s153, 0
    %s156 = sadd.s32 %s155, 1
    %s157 = scalar_select %p154, %s155, %s156
    %p160 = pneg %p154
    %p161 = scmp.eq.s32.totalorder %s10, 7
    %p162 = por %p160, %p161
    %p163 = scmp.ne.s32.totalorder %s155, %s158
    %p164 = scmp.eq.s32.totalorder %s10, 0
    %p165 = por %p163, %p164
    %p166 = scmp.ne.s32.totalorder %s155, %s158
    %p167 = scmp.eq.s32.totalorder %s15, 7
    %p168 = por %p166, %p167
    %p169 = scmp.ne.s32.totalorder %s158, %s159
    %p170 = scmp.eq.s32.totalorder %s15, 0
    %p171 = por %p169, %p170
    %p172 = scmp.ne.s32.totalorder %s158, %s159
    %p173 = scmp.eq.s32.totalorder %s16, 7
    %p174 = por %p172, %p173
    %p176 = scmp.ne.s32.totalorder %s159, %s175
    %p177 = scmp.eq.s32.totalorder %s16, 0
    %p178 = por %p176, %p177
    %p179 = scmp.le.s32.totalorder 1, %s10
    %p180 = scmp.lt.s32.totalorder %s10, 9
    %p181 = pnand %p179, %p180
    %p182 = pneg %p181
    // Predicated region
    $region9: #{attention_forward.8} parent=5 // pred_check
      _
    $region10: #{attention_forward.8} parent=5 // pred_check_branch
      %184 = sbr.rel (%p181) target = $region12
    $region11: #{attention_forward.8} parent=5 // pred_region
      %s185 = ssub.s32 %s10, 1
    $region12: #{attention_forward.8} parent=5 // pred_fallthru
      _
    %p186 = scmp.lt.s32.totalorder %s10, 8
    // Predicated region
    $region13: #{attention_forward.8} parent=5 // pred_check
      %p187 = pneg %p186
    $region14: #{attention_forward.8} parent=5 // pred_check_branch
      %189 = sbr.rel (%p187) target = $region16
    $region15: #{attention_forward.8} parent=5 // pred_region
      // Predicated region
      $region17: #{attention_forward.8} parent=15 // pred_check
        %p190 = pneg %p51
      $region18: #{attention_forward.8} parent=15 // pred_check_branch
        %192 = sbr.rel (%p190) target = $region20
      $region19: #{attention_forward.8} parent=15 // pred_region
        %p193 = scmp.lt.s32.totalorder %s17, 7
        %s194 = scalar_select %p193, %s17, 7
        %p195 = scmp.lt.s32.totalorder %s18, 0
        %s196 = scalar_select %p195, %s18, 0
        %s197 = sadd.s32 %s196, %s194
        %s198 = smul.addr %s197, 8
        %s199 = scalar_lea.vmem %s0, %s198
      $region20: #{attention_forward.8} parent=15 // pred_fallthru
        _
      // Predicated region
      $region21: #{attention_forward.8} parent=15 // pred_check
        %p200 = pneg %p79
      $region22: #{attention_forward.8} parent=15 // pred_check_branch
        %202 = sbr.rel (%p200) target = $region24
      $region23: #{attention_forward.8} parent=15 // pred_region
        %p203 = scmp.lt.s32.totalorder %s17, 7
        %s204 = scalar_select %p203, %s17, 7
        %p205 = scmp.lt.s32.totalorder %s19, 0
        %s206 = scalar_select %p205, %s19, 0
        %s207 = sadd.s32 %s206, %s204
        %s208 = smul.addr %s207, 8
        %s209 = scalar_lea.vmem %s1, %s208
      $region24: #{attention_forward.8} parent=15 // pred_fallthru
        _
      // Predicated region
      $region25: #{attention_forward.8} parent=15 // pred_check
        %p210 = pneg %p107
      $region26: #{attention_forward.8} parent=15 // pred_check_branch
        %212 = sbr.rel (%p210) target = $region28
      $region27: #{attention_forward.8} parent=15 // pred_region
        %p213 = scmp.lt.s32.totalorder %s17, 7
        %s214 = scalar_select %p213, %s17, 7
        %p215 = scmp.lt.s32.totalorder %s19, 0
        %s216 = scalar_select %p215, %s19, 0
        %s217 = sadd.s32 %s216, %s214
        %s218 = smul.addr %s217, 8
        %s219 = scalar_lea.vmem %s2, %s218
      $region28: #{attention_forward.8} parent=15 // pred_fallthru
        _
      // Predicated region
      $region29: #{attention_forward.8} parent=15 // pred_check
        %p220 = pneg %p137
      $region30: #{attention_forward.8} parent=15 // pred_check_branch
        %222 = sbr.rel (%p220) target = $region32
      $region31: #{attention_forward.8} parent=15 // pred_region
        %p223 = scmp.lt.s32.totalorder %s17, 7
        %s224 = scalar_select %p223, %s17, 7
        %p225 = scmp.lt.s32.totalorder %s18, 0
        %s226 = scalar_select %p225, %s18, 0
        %p227 = scmp.lt.s32.totalorder %s19, 0
        %s228 = scalar_select %p227, %s19, 0
        %s229 = sadd.s32 %s228, %s226
        %s230 = sadd.s32 %s229, %s224
        %s231 = smul.addr %s230, 8
        %s232 = scalar_lea.vmem %s3, %s231
      $region32: #{attention_forward.8} parent=15 // pred_fallthru
        _
    $region16: #{attention_forward.8} parent=5 // pred_fallthru
      _
    %p233 = scmp.le.s32.totalorder 1, %s10
    %p234 = scmp.lt.s32.totalorder %s10, 9
    %p235 = pnand %p233, %p234
    %p236 = pneg %p235
    // Predicated region
    $region33: #{attention_forward.8} parent=5 // pred_check
      _
    $region34: #{attention_forward.8} parent=5 // pred_check_branch
      %238 = sbr.rel (%p235) target = $region36
    $region35: #{attention_forward.8} parent=5 // pred_region
      %s239 = ssub.s32 %s10, 1
      %p240 = scmp.lt.s32.totalorder %s20, 7
      %s241 = scalar_select %p240, %s20, 7
      %p242 = scmp.lt.s32.totalorder %s21, 0
      %s243 = scalar_select %p242, %s21, 0
      %s244 = sadd.s32 %s243, %s241
      %s245 = smul.addr %s244, 8
      %s246 = scalar_lea.vmem %s0, %s245
      %p247 = pneg %p57
      %p248 = pneg %p54
      %p249 = scmp.lt.s32.totalorder %s20, 7
      %s250 = scalar_select %p249, %s20, 7
      %p251 = scmp.lt.s32.totalorder %s22, 0
      %s252 = scalar_select %p251, %s22, 0
      %s253 = sadd.s32 %s252, %s250
      %s254 = smul.addr %s253, 8
      %s255 = scalar_lea.vmem %s1, %s254
      %p256 = pneg %p85
      %p257 = pneg %p82
      %p258 = scmp.lt.s32.totalorder %s20, 7
      %s259 = scalar_select %p258, %s20, 7
      %p260 = scmp.lt.s32.totalorder %s22, 0
      %s261 = scalar_select %p260, %s22, 0
      %s262 = sadd.s32 %s261, %s259
      %s263 = smul.addr %s262, 8
      %s264 = scalar_lea.vmem %s2, %s263
      %p265 = pneg %p113
      %p266 = pneg %p110
      %p267 = scmp.lt.s32.totalorder %s20, 7
      %s268 = scalar_select %p267, %s20, 7
      %p269 = scmp.lt.s32.totalorder %s21, 0
      %s270 = scalar_select %p269, %s21, 0
      %p271 = scmp.lt.s32.totalorder %s22, 0
      %s272 = scalar_select %p271, %s22, 0
      %s273 = sadd.s32 %s272, %s270
      %s274 = sadd.s32 %s273, %s268
      %s275 = smul.addr %s274, 8
      %s276 = scalar_lea.vmem %s3, %s275
      %p277 = pneg %p143
      %p278 = pneg %p140
      %p279 = pneg %p171
      %p280 = pneg %p168
      %p281 = scmp.lt.s32.totalorder %s20, 7
      %s282 = scalar_select %p281, %s20, 7
      %p283 = scmp.lt.s32.totalorder %s21, 0
      %s284 = scalar_select %p283, %s21, 0
      %s285 = sadd.s32 %s284, %s282
      %s286 = smul.addr %s285, 8
      %s287 = scalar_lea.vmem %s4, %s286
      %p288 = scmp.lt.s32.totalorder %s20, 7
      %s289 = scalar_select %p288, %s20, 7
      %p290 = scmp.lt.s32.totalorder %s21, 0
      %s291 = scalar_select %p290, %s21, 0
      %s292 = sadd.s32 %s291, %s289
      %s293 = smul.addr %s292, 8
      %s294 = scalar_lea.vmem %s0, %s293
      %p295 = scmp.lt.s32.totalorder %s20, 7
      %s296 = scalar_select %p295, %s20, 7
      %p297 = scmp.lt.s32.totalorder %s22, 0
      %s298 = scalar_select %p297, %s22, 0
      %s299 = sadd.s32 %s298, %s296
      %s300 = smul.addr %s299, 8
      %s301 = scalar_lea.vmem %s1, %s300
      %p302 = scmp.lt.s32.totalorder %s20, 7
      %s303 = scalar_select %p302, %s20, 7
      %p304 = scmp.lt.s32.totalorder %s22, 0
      %s305 = scalar_select %p304, %s22, 0
      %s306 = sadd.s32 %s305, %s303
      %s307 = smul.addr %s306, 8
      %s308 = scalar_lea.vmem %s2, %s307
      %p309 = scmp.lt.s32.totalorder %s20, 7
      %s310 = scalar_select %p309, %s20, 7
      %p311 = scmp.lt.s32.totalorder %s21, 0
      %s312 = scalar_select %p311, %s21, 0
      %p313 = scmp.lt.s32.totalorder %s22, 0
      %s314 = scalar_select %p313, %s22, 0
      %s315 = sadd.s32 %s314, %s312
      %s316 = sadd.s32 %s315, %s310
      %s317 = smul.addr %s316, 8
      %s318 = scalar_lea.vmem %s3, %s317
      %p319 = scmp.lt.s32.totalorder %s20, 7
      %s320 = scalar_select %p319, %s20, 7
      %p321 = scmp.lt.s32.totalorder %s21, 0
      %s322 = scalar_select %p321, %s21, 0
      %s323 = sadd.s32 %s322, %s320
      %s324 = smul.addr %s323, 8
      %s325 = scalar_lea.vmem %s4, %s324
      %p326 = scmp.eq.s32.totalorder %s22, 0
      // Predicated region
      $region37: #{attention_forward.8} parent=35 // pred_check
        %p327 = pneg %p326
      $region38: #{attention_forward.8} parent=35 // pred_check_branch
        %329 = sbr.rel (%p327) target = $region40
      $region39: #{attention_forward.8} parent=35 // pred_region
        %vm330 = vcmask 7168
        %331 = vst.msk [vmem:[#allocation2] sm:$0xff] %vm330, -inf
        %332 = vst.msk [vmem:[#allocation3] sm:$0xff] %vm330, 0.0
        %vm333 = vcmask 130048
        %334 = vst.msk [vmem:[#allocation4] sm:$0xff] %vm333, 0.0
      $region40: #{attention_forward.8} parent=35 // pred_fallthru
        _
      %v335 = vld [vmem:[%s294] sm:$0xff]
      %v336 = vld [vmem:[%s301] sm:$0xff]
      %v337 = vld [vmem:[%s308] sm:$0xff]
      %v338 = vld [vmem:[%s318] sm:$0xff]
      %vm339 = vcmask 130048
      %v341 = vsel %vm339, %v335, 0
      %v344 = vsel %vm339, %v336, 0
      %346 = vmatprep.subr.mxu0 0.0
      %347 = vmatpush1.xpose.msra.mxu0 0.0
      %348 = vmatprep.subr.mxu0 0.0
      %349 = vmatpush1.xpose.msra.mxu0 0.0
      %350 = vmatprep.subr.mxu0 0.0
      %351 = vmatpush1.xpose.msra.mxu0 0.0
      %352 = vmatprep.subr.mxu0 0.0
      %353 = vmatpush1.xpose.msra.mxu0 0.0
      %354 = vmatprep.subr.mxu0 0.0
      %355 = vmatpush1.xpose.msra.mxu0 0.0
      %356 = vmatprep.subr.mxu0 0.0
      %357 = vmatpush1.xpose.msra.mxu0 0.0
      %358 = vmatprep.subr.mxu0 0.0
      %359 = vmatpush1.xpose.msra.mxu0 0.0
      %360 = vmatprep.subr.mxu0 0.0
      %361 = vmatpush1.xpose.msra.mxu0 0.0
      %362 = vmatprep.subr.mxu0 0.0
      %363 = vmatpush1.xpose.msra.mxu0 0.0
      %364 = vmatprep.subr.mxu0 0.0
      %365 = vmatpush1.xpose.msra.mxu0 0.0
      %366 = vmatprep.subr.mxu0 0.0
      %367 = vmatpush1.xpose.msra.mxu0 0.0
      %368 = vmatprep.subr.mxu0 0.0
      %369 = vmatpush1.xpose.msra.mxu0 0.0
      %370 = vmatprep.subr.mxu0 0.0
      %371 = vmatpush1.xpose.msra.mxu0 0.0
      %372 = vmatprep.subr.mxu0 0.0
      %373 = vmatpush1.xpose.msra.mxu0 0.0
      %374 = vmatprep.subr.mxu0 0.0
      %375 = vmatpush1.xpose.msra.mxu0 0.0
      %376 = vmatprep.subr.mxu0 0.0
      %377 = vmatpush1.xpose.msra.mxu0 %v344
      %378 = vmatprep.subr.mxu0 0.0
      %379 = vmatpush2.xpose.msra.mxu0 0.0
      %380 = vmatprep.subr.mxu0 0.0
      %381 = vmatpush2.xpose.msra.mxu0 0.0
      %382 = vmatprep.subr.mxu0 0.0
      %383 = vmatpush2.xpose.msra.mxu0 0.0
      %384 = vmatprep.subr.mxu0 0.0
      %385 = vmatpush2.xpose.msra.mxu0 0.0
      %386 = vmatprep.subr.mxu0 0.0
      %387 = vmatpush2.xpose.msra.mxu0 0.0
      %388 = vmatprep.subr.mxu0 0.0
      %389 = vmatpush2.xpose.msra.mxu0 0.0
      %390 = vmatprep.subr.mxu0 0.0
      %391 = vmatpush2.xpose.msra.mxu0 0.0
      %392 = vmatprep.subr.mxu0 0.0
      %393 = vmatpush2.xpose.msra.mxu0 0.0
      %394 = vmatprep.subr.mxu0 0.0
      %395 = vmatpush2.xpose.msra.mxu0 0.0
      %396 = vmatprep.subr.mxu0 0.0
      %397 = vmatpush2.xpose.msra.mxu0 0.0
      %398 = vmatprep.subr.mxu0 0.0
      %399 = vmatpush2.xpose.msra.mxu0 0.0
      %400 = vmatprep.subr.mxu0 0.0
      %401 = vmatpush2.xpose.msra.mxu0 0.0
      %402 = vmatprep.subr.mxu0 0.0
      %403 = vmatpush2.xpose.msra.mxu0 0.0
      %404 = vmatprep.subr.mxu0 0.0
      %405 = vmatpush2.xpose.msra.mxu0 0.0
      %406 = vmatprep.subr.mxu0 0.0
      %407 = vmatpush2.xpose.msra.mxu0 0.0
      %408 = vmatprep.subr.mxu0 0.0
      %409 = vmatpush2.xpose.msra.mxu0 0.0
      %410 = vmatprep.mubr.f32.mxu0 0.0
      %411 = vmatmul.mubr.f32.gmra.mxu0 %v341
      %v412 = vpop.f32.mrf.mxu0
      %v413 = vadd.f32 %v338, %v412
      %v414 = vpop.f32.mrf.mxu0
      %415 = vdwg.mxu0
      %v416 = vld [vmem:[#allocation2] sm:$0xff]
      %vm417 = vcmask 64512
      %v418 = vsel %vm417, %v413, -inf
      %419 = vmax.xlane.f32.xlu0 %v418
      %v420 = vpop.xlane.xlu0 %419
      %v421 = vmax.f32 %v416, %v420
      %v422 = vsub.f32 %v416, %v421
      %v423 = vmul.f32 %v422, 1.442695
      %v424 = vpow.pop %v423
      %426 = vset.pattern.permute.xlu0 0
      %427 = vperm.xlu0 %426, %v421
      %v428 = vpop.permute.xlu0 %427
      %v430 = vsub.f32 %v413, %v428
      %v431 = vmul.f32 %v430, 1.442695
      %v432 = vpow.pop %v431
      %v433 = vld [vmem:[#allocation3] sm:$0xff]
      %v434 = vmul.f32 %v424, %v433
      %v435 = vsel %vm417, %v432, 0.0
      %436 = vadd.xlane.f32.xlu0 %v435
      %v437 = vpop.xlane.xlu0 %436
      %v438 = vadd.f32 %v434, %v437
      %vm439 = vcmask 7168
      %440 = vst.msk [vmem:[#allocation3] sm:$0xff] %vm439, %v438
      %v441 = vld [vmem:[#allocation4] sm:$0xff]
      %443 = vset.pattern.permute.xlu0 0
      %444 = vperm.xlu0 %443, %v424
      %v445 = vpop.permute.xlu0 %444
      %v447 = vmul.f32 %v445, %v441
      %v449 = vsel %vm417, %v432, 0
      %451 = vmatprep.subr.mxu0 0.0
      %452 = vmatpush1.msra.mxu0 0.0
      %453 = vmatprep.subr.mxu0 0.0
      %454 = vmatpush1.msra.mxu0 0.0
      %455 = vmatprep.subr.mxu0 0.0
      %456 = vmatpush1.msra.mxu0 0.0
      %457 = vmatprep.subr.mxu0 0.0
      %458 = vmatpush1.msra.mxu0 0.0
      %459 = vmatprep.subr.mxu0 0.0
      %460 = vmatpush1.msra.mxu0 0.0
      %461 = vmatprep.subr.mxu0 0.0
      %462 = vmatpush1.msra.mxu0 0.0
      %463 = vmatprep.subr.mxu0 0.0
      %464 = vmatpush1.msra.mxu0 0.0
      %465 = vmatprep.subr.mxu0 0.0
      %466 = vmatpush1.msra.mxu0 0.0
      %467 = vmatprep.subr.mxu0 0.0
      %468 = vmatpush1.msra.mxu0 0.0
      %469 = vmatprep.subr.mxu0 0.0
      %470 = vmatpush1.msra.mxu0 0.0
      %471 = vmatprep.subr.mxu0 0.0
      %472 = vmatpush1.msra.mxu0 0.0
      %473 = vmatprep.subr.mxu0 0.0
      %474 = vmatpush1.msra.mxu0 0.0
      %475 = vmatprep.subr.mxu0 0.0
      %476 = vmatpush1.msra.mxu0 0.0
      %477 = vmatprep.subr.mxu0 0.0
      %478 = vmatpush1.msra.mxu0 0.0
      %479 = vmatprep.subr.mxu0 0.0
      %480 = vmatpush1.msra.mxu0 0.0
      %481 = vmatprep.subr.mxu0 0.0
      %482 = vmatpush1.msra.mxu0 %v337
      %483 = vmatprep.subr.mxu0 0.0
      %484 = vmatpush2.msra.mxu0 0.0
      %485 = vmatprep.subr.mxu0 0.0
      %486 = vmatpush2.msra.mxu0 0.0
      %487 = vmatprep.subr.mxu0 0.0
      %488 = vmatpush2.msra.mxu0 0.0
      %489 = vmatprep.subr.mxu0 0.0
      %490 = vmatpush2.msra.mxu0 0.0
      %491 = vmatprep.subr.mxu0 0.0
      %492 = vmatpush2.msra.mxu0 0.0
      %493 = vmatprep.subr.mxu0 0.0
      %494 = vmatpush2.msra.mxu0 0.0
      %495 = vmatprep.subr.mxu0 0.0
      %496 = vmatpush2.msra.mxu0 0.0
      %497 = vmatprep.subr.mxu0 0.0
      %498 = vmatpush2.msra.mxu0 0.0
      %499 = vmatprep.subr.mxu0 0.0
      %500 = vmatpush2.msra.mxu0 0.0
      %501 = vmatprep.subr.mxu0 0.0
      %502 = vmatpush2.msra.mxu0 0.0
      %503 = vmatprep.subr.mxu0 0.0
      %504 = vmatpush2.msra.mxu0 0.0
      %505 = vmatprep.subr.mxu0 0.0
      %506 = vmatpush2.msra.mxu0 0.0
      %507 = vmatprep.subr.mxu0 0.0
      %508 = vmatpush2.msra.mxu0 0.0
      %509 = vmatprep.subr.mxu0 0.0
      %510 = vmatpush2.msra.mxu0 0.0
      %511 = vmatprep.subr.mxu0 0.0
      %512 = vmatpush2.msra.mxu0 0.0
      %513 = vmatprep.subr.mxu0 0.0
      %514 = vmatpush2.msra.mxu0 0.0
      %515 = vmatprep.mubr.f32.mxu0 0.0
      %516 = vmatmul.mubr.f32.gmra.mxu0 %v449
      %v517 = vpop.f32.mrf.mxu0
      %v518 = vadd.f32 0.0, %v517
      %v519 = vpop.f32.mrf.mxu0
      %520 = vdwg.mxu0
      %v521 = vadd.f32 %v447, %v518
      %522 = vst.msk [vmem:[#allocation4] sm:$0xff] %vm339, %v521
      %523 = vst.msk [vmem:[#allocation2] sm:$0xff] %vm439, %v421
      // Predicated region
      $region41: #{attention_forward.8} parent=35 // pred_check
        %p524 = pneg %p326
      $region42: #{attention_forward.8} parent=35 // pred_check_branch
        %526 = sbr.rel (%p524) target = $region44
      $region43: #{attention_forward.8} parent=35 // pred_region
        %v527 = vld [vmem:[#allocation3] sm:$0xff]
        %v528 = vrcp.pop %v527
        %v529 = vld [vmem:[#allocation4] sm:$0xff]
        %531 = vset.pattern.permute.xlu0 0
        %532 = vperm.xlu0 %531, %v528
        %v533 = vpop.permute.xlu0 %532
        %v535 = vmul.f32 %v529, %v533
        %536 = vst.msk [vmem:[%s325] sm:$0xff] %vm339, %v535
      $region44: #{attention_forward.8} parent=35 // pred_fallthru
        _
      %p537 = scmp.lt.s32.totalorder %s20, 7
      %s538 = scalar_select %p537, %s20, 7
      %p539 = scmp.lt.s32.totalorder %s21, 0
      %s540 = scalar_select %p539, %s21, 0
      %s541 = sadd.s32 %s540, %s538
      %s542 = smul.addr %s541, 8
      %s543 = scalar_lea.vmem %s4, %s542
      // Predicated region
      $region45: #{attention_forward.8} parent=35 // pred_check
        %p544 = pneg %p168
      $region46: #{attention_forward.8} parent=35 // pred_check_branch
        %546 = sbr.rel (%p544) target = $region48
      $region47: #{attention_forward.8} parent=35 // pred_region
        _
      $region48: #{attention_forward.8} parent=35 // pred_fallthru
        _
    $region36: #{attention_forward.8} parent=5 // pred_fallthru
      _
    %p547 = scmp.le.s32.totalorder 2, %s10
    // Predicated region
    $region49: #{attention_forward.8} parent=5 // pred_check
      %p548 = pneg %p547
    $region50: #{attention_forward.8} parent=5 // pred_check_branch
      %550 = sbr.rel (%p548) target = $region52
    $region51: #{attention_forward.8} parent=5 // pred_region
      %s551 = ssub.s32 %s10, 2
      // Predicated region
      $region53: #{attention_forward.8} parent=51 // pred_check
        %p552 = pneg %p174
      $region54: #{attention_forward.8} parent=51 // pred_check_branch
        %554 = sbr.rel (%p552) target = $region56
      $region55: #{attention_forward.8} parent=51 // pred_region
        %p555 = scmp.lt.s32.totalorder %s23, 7
        %s556 = scalar_select %p555, %s23, 7
        %p557 = scmp.lt.s32.totalorder %s24, 0
        %s558 = scalar_select %p557, %s24, 0
        %s559 = sadd.s32 %s558, %s556
        %s560 = smul.addr %s559, 8
        %s561 = scalar_lea.vmem %s4, %s560
      $region56: #{attention_forward.8} parent=51 // pred_fallthru
        _
    $region52: #{attention_forward.8} parent=5 // pred_fallthru
      _
  $region6: #{attention_forward.8} parent=0 // loop_footer
    %s14 = sadd.s32 1, %s10
  $region7: #{attention_forward.8} parent=0 // loop_footer_branch
    %9 = sbr.rel target = $region3
  $region8: #{attention_forward.8} parent=0 // loop_exit
    _

// kernel: attention_forward.9
$region0: #{attention_forward.9}
  #allocation0 [shape = 'u32[]', space=smem, size = 0x4, offset = 0x4, fixed_abs, tag = 'smem constant byte address 0x4 - core index']
  #allocation1 [shape = 'u32[144,128]{1,0:T(1,128)}', space=vmem, size = 0x12000, scoped, tag = 'internal scratch']
  #allocation2 [shape = 'f32[16,32]{1,0:T(8,128)}', space=vmem, size = 0x2000, scoped, tag = 'scratch operand']
  %s0 = inlined_call_operand.vmem [shape: f32[16,64], index: 0, kind: input, shape index: {}]
  %s1 = inlined_call_operand.vmem [shape: f32[64,32], index: 1, kind: input, shape index: {}]
  %s2 = inlined_call_operand.vmem [shape: f32[1,32], index: 2, kind: input, shape index: {}]
  %s3 = inlined_call_operand.hbm [shape: f32[16,32], index: 3, kind: output, shape index: {}]
  %s4 = sld [smem:[#allocation0]]
  $region30: #{attention_forward.9} parent=0
    _
  %s6 = ssub.s32 1, %s4
  %s7 = scalar_select 0, %s6, %s4
  $region1: #{attention_forward.9} parent=0
    #allocation3 [shape = 'u8[8192]{0}', space=vmem, size = 0x2000, scoped, tag = 'output window, operand 0, single buffered']
    #allocation4 [shape = 's32[1]{0}', space=sflag, size = 0x4, scoped, tag = 'scoped memory for attention_forward.9']
    %8 = vsyncpa [#allocation4], 0
    // Predicated region
    $region2: #{attention_forward.9} parent=1 // pred_check
      _
    $region3: #{attention_forward.9} parent=1 // pred_check_branch
      %10 = sbr.rel (0) target = $region5
    $region4: #{attention_forward.9} parent=1 // pred_region
      _
    $region5: #{attention_forward.9} parent=1 // pred_fallthru
      _
    // Predicated region
    $region6: #{attention_forward.9} parent=1 // pred_check
      _
    $region7: #{attention_forward.9} parent=1 // pred_check_branch
      %12 = sbr.rel (0) target = $region9
    $region8: #{attention_forward.9} parent=1 // pred_region
      _
    $region9: #{attention_forward.9} parent=1 // pred_fallthru
      _
    // Predicated region
    $region10: #{attention_forward.9} parent=1 // pred_check
      _
    $region11: #{attention_forward.9} parent=1 // pred_check_branch
      %14 = sbr.rel (0) target = $region13
    $region12: #{attention_forward.9} parent=1 // pred_region
      _
    $region13: #{attention_forward.9} parent=1 // pred_fallthru
      _
    %p15 = scmp.eq.s32.totalorder 0, 0
    // Predicated region
    $region14: #{attention_forward.9} parent=1 // pred_check
      %p16 = pneg %p15
    $region15: #{attention_forward.9} parent=1 // pred_check_branch
      %18 = sbr.rel (%p16) target = $region17
    $region16: #{attention_forward.9} parent=1 // pred_region
      %vm19 = vcmask 261120
      %20 = vst.msk [vmem:[#allocation2] sm:$0xff] %vm19, 0.0
      %21 = vst.msk [vmem:[#allocation2 + $0x8] sm:$0xff] %vm19, 0.0
    $region17: #{attention_forward.9} parent=1 // pred_fallthru
      _
    %v22 = vld [vmem:[#allocation2] sm:$0xff]
    %v23 = vld [vmem:[#allocation2 + $0x8] sm:$0xff]
    %v24 = vld [vmem:[%s0] sm:$0xff]
    %v25 = vld [vmem:[%s0 + $0x8] sm:$0xff]
    %v26 = vld [vmem:[%s1] sm:$0xff]
    %v27 = vld [vmem:[%s1 + $0x8] sm:$0xff]
    %v28 = vld [vmem:[%s1 + $0x10] sm:$0xff]
    %v29 = vld [vmem:[%s1 + $0x18] sm:$0xff]
    %v30 = vld [vmem:[%s1 + $0x20] sm:$0xff]
    %v31 = vld [vmem:[%s1 + $0x28] sm:$0xff]
    %v32 = vld [vmem:[%s1 + $0x30] sm:$0xff]
    %v33 = vld [vmem:[%s1 + $0x38] sm:$0xff]
    %vm34 = vcmask 523264
    %v36 = vsel %vm34, %v24, 0
    %v39 = vsel %vm34, %v25, 0
    %41 = vmatprep.subr.mxu0 0.0
    %42 = vmatpush1.msra.mxu0 0.0
    %43 = vmatprep.subr.mxu0 0.0
    %44 = vmatpush1.msra.mxu0 0.0
    %45 = vmatprep.subr.mxu0 0.0
    %46 = vmatpush1.msra.mxu0 0.0
    %47 = vmatprep.subr.mxu0 0.0
    %48 = vmatpush1.msra.mxu0 0.0
    %49 = vmatprep.subr.mxu0 0.0
    %50 = vmatpush1.msra.mxu0 0.0
    %51 = vmatprep.subr.mxu0 0.0
    %52 = vmatpush1.msra.mxu0 0.0
    %53 = vmatprep.subr.mxu0 0.0
    %54 = vmatpush1.msra.mxu0 0.0
    %55 = vmatprep.subr.mxu0 0.0
    %56 = vmatpush1.msra.mxu0 0.0
    %57 = vmatprep.subr.mxu0 0.0
    %58 = vmatpush1.msra.mxu0 %v33
    %59 = vmatprep.subr.mxu0 0.0
    %60 = vmatpush1.msra.mxu0 %v32
    %61 = vmatprep.subr.mxu0 0.0
    %62 = vmatpush1.msra.mxu0 %v31
    %63 = vmatprep.subr.mxu0 0.0
    %64 = vmatpush1.msra.mxu0 %v30
    %65 = vmatprep.subr.mxu0 0.0
    %66 = vmatpush1.msra.mxu0 %v29
    %67 = vmatprep.subr.mxu0 0.0
    %68 = vmatpush1.msra.mxu0 %v28
    %69 = vmatprep.subr.mxu0 0.0
    %70 = vmatpush1.msra.mxu0 %v27
    %71 = vmatprep.subr.mxu0 0.0
    %72 = vmatpush1.msra.mxu0 %v26
    %73 = vmatprep.subr.mxu0 0.0
    %74 = vmatpush2.msra.mxu0 0.0
    %75 = vmatprep.subr.mxu0 0.0
    %76 = vmatpush2.msra.mxu0 0.0
    %77 = vmatprep.subr.mxu0 0.0
    %78 = vmatpush2.msra.mxu0 0.0
    %79 = vmatprep.subr.mxu0 0.0
    %80 = vmatpush2.msra.mxu0 0.0
    %81 = vmatprep.subr.mxu0 0.0
    %82 = vmatpush2.msra.mxu0 0.0
    %83 = vmatprep.subr.mxu0 0.0
    %84 = vmatpush2.msra.mxu0 0.0
    %85 = vmatprep.subr.mxu0 0.0
    %86 = vmatpush2.msra.mxu0 0.0
    %87 = vmatprep.subr.mxu0 0.0
    %88 = vmatpush2.msra.mxu0 0.0
    %89 = vmatprep.subr.mxu0 0.0
    %90 = vmatpush2.msra.mxu0 0.0
    %91 = vmatprep.subr.mxu0 0.0
    %92 = vmatpush2.msra.mxu0 0.0
    %93 = vmatprep.subr.mxu0 0.0
    %94 = vmatpush2.msra.mxu0 0.0
    %95 = vmatprep.subr.mxu0 0.0
    %96 = vmatpush2.msra.mxu0 0.0
    %97 = vmatprep.subr.mxu0 0.0
    %98 = vmatpush2.msra.mxu0 0.0
    %99 = vmatprep.subr.mxu0 0.0
    %100 = vmatpush2.msra.mxu0 0.0
    %101 = vmatprep.subr.mxu0 0.0
    %102 = vmatpush2.msra.mxu0 0.0
    %103 = vmatprep.subr.mxu0 0.0
    %104 = vmatpush2.msra.mxu0 0.0
    %105 = vmatprep.mubr.f32.mxu0 0.0
    %106 = vmatmul.mubr.f32.gmra.mxu0 %v36
    %v107 = vpop.f32.mrf.mxu0
    %v108 = vadd.f32 0.0, %v107
    %v109 = vpop.f32.mrf.mxu0
    %110 = vmatprep.mubr.f32.mxu0 0.0
    %111 = vmatmul.mubr.f32.gmra.mxu0 %v39
    %v112 = vpop.f32.mrf.mxu0
    %v113 = vadd.f32 0.0, %v112
    %v114 = vpop.f32.mrf.mxu0
    %115 = vdwg.mxu0
    %v116 = vadd.f32 %v22, %v108
    %v117 = vadd.f32 %v23, %v113
    %vm118 = vcmask 261120
    %119 = vst.msk [vmem:[#allocation2] sm:$0xff] %vm118, %v116
    %120 = vst.msk [vmem:[#allocation2 + $0x8] sm:$0xff] %vm118, %v117
    // Predicated region
    $region18: #{attention_forward.9} parent=1 // pred_check
      %p121 = pneg %p15
    $region19: #{attention_forward.9} parent=1 // pred_check_branch
      %123 = sbr.rel (%p121) target = $region21
    $region20: #{attention_forward.9} parent=1 // pred_region
      %v124 = vld [vmem:[#allocation2] sm:$0xff]
      %v125 = vld [vmem:[#allocation2 + $0x8] sm:$0xff]
      %v126 = vld [vmem:[%s2] sm:$0x1]
      %v128 = vlaneseq
      %v129 = vshrl.u32 %v128, 7
      %v130 = vsub.s32 0, %v129
      %v131 = vrot.slane %v126, %v130
      %v133 = vadd.f32 %v124, %v131
      %v134 = vadd.f32 %v125, %v131
      %135 = vst.msk [vmem:[#allocation3] sm:$0xff] %vm118, %v133
      %136 = vst.msk [vmem:[#allocation3 + $0x8] sm:$0xff] %vm118, %v134
    $region21: #{attention_forward.9} parent=1 // pred_fallthru
      _
    // Predicated region
    $region22: #{attention_forward.9} parent=1 // pred_check
      _
    $region23: #{attention_forward.9} parent=1 // pred_check_branch
      %138 = sbr.rel (0) target = $region25
    $region24: #{attention_forward.9} parent=1 // pred_region
      %s140 = ssub.s32 256, 256
      %141 = vsyncadd [#allocation4], %s140
      %s142 = sshll.u32 [#allocation3], 4
      %s143 = int_to_ptr.vmem [resolvable:$true] %s142
      %148 = dma.vmem_to_hbm [thread:$0]  %s143, 256, %s3, [#allocation4], 128, 128, 8
    $region25: #{attention_forward.9} parent=1 // pred_fallthru
      _
    // Predicated region
    $region26: #{attention_forward.9} parent=1 // pred_check
      _
    $region27: #{attention_forward.9} parent=1 // pred_check_branch
      %150 = sbr.rel (0) target = $region29
    $region28: #{attention_forward.9} parent=1 // pred_region
      %151 = dma.done [#allocation4], 256
    $region29: #{attention_forward.9} parent=1 // pred_fallthru
      _
    %152 = vsyncpa [#allocation4], 1

</llo_original>
